<compile_context>
chip_gen: v5e
topology: v5e:2x2
jax: 0.10.0
libtpu: 0.0.40
codegen_flags: <defaults>
</compile_context>

<pallas_src>
import jax
import jax.numpy as jnp
from jax.experimental import pallas as pl
from jax.experimental.pallas import tpu as pltpu


LAYER_SIZES = [2, 10, 100, 150, 100, 10, 2]   # in/out features of the 6 Linear layers
N_LAYERS = len(LAYER_SIZES) - 1
PAD_W = 256      # padded hidden feature width (>= 150, lane aligned)
PAD_IN = 128     # padded input lane width  (>= 2, lane aligned)
PAD_OUT = 128    # padded output lane width (>= 2, lane aligned, lane-dense stores)
IN_FEATURES = LAYER_SIZES[0]
OUT_FEATURES = LAYER_SIZES[-1]


def mlp_kernel(x_ref, w_ref, b_ref, o_ref):
    """Whole 6-layer MLP forward for one (TB,) batch tile.

    x_ref : (TB, PAD_IN)               zero-padded input activations
    w_ref : (N_LAYERS, PAD_W, PAD_W)   zero-padded (in, out) weight slab (VMEM resident)
    b_ref : (N_LAYERS, 8, PAD_W)       zero-padded bias slab, bias lives in row 0
    o_ref : (TB, PAD_OUT)
    """
    h = x_ref[...]  # (TB, 128)

    # Layer 0: (TB, 128) @ (128, 256). Rows >= 2 of w[0] are zero -> exact.
    h = jnp.dot(h, w_ref[0, :PAD_IN, :], preferred_element_type=jnp.float32)
    h = jnp.maximum(h + b_ref[0, 0:1, :], 0.0)

    # Layers 1..4: uniform (TB, 256) @ (256, 256) MXU matmuls, static unroll.
    for i in range(1, N_LAYERS - 1):
        h = jnp.dot(h, w_ref[i], preferred_element_type=jnp.float32)
        h = jnp.maximum(h + b_ref[i, 0:1, :], 0.0)

    # Layer 5 (no ReLU): (TB, 256) @ (256, 128) -> lane-dense 128-wide output.
    h = jnp.dot(h, w_ref[N_LAYERS - 1, :, :PAD_OUT],
                preferred_element_type=jnp.float32)
    o_ref[...] = (h + b_ref[N_LAYERS - 1, 0:1, :PAD_OUT]).astype(o_ref.dtype)


def init_params(key):
    """Deterministic init mimicking nn.Linear's default U(-1/sqrt(in), 1/sqrt(in))."""
    params = []
    for i in range(N_LAYERS):
        fan_in, fan_out = LAYER_SIZES[i], LAYER_SIZES[i + 1]
        key, kw, kb = jax.random.split(key, 3)
        bound = 1.0 / jnp.sqrt(jnp.float32(fan_in))
        # Stored as (in, out): y = x @ W + b matches F.linear(x, W_pt, b) with W = W_pt.T.
        w = jax.random.uniform(kw, (fan_in, fan_out), jnp.float32, -bound, bound)
        b = jax.random.uniform(kb, (fan_out,), jnp.float32, -bound, bound)
        params.append((w, b))
    return params


def pack_params(params):
    """Pack all layers into two zero-padded slabs (done once, reused every call)."""
    w_slab = jnp.zeros((N_LAYERS, PAD_W, PAD_W), jnp.float32)
    b_slab = jnp.zeros((N_LAYERS, 8, PAD_W), jnp.float32)
    for i, (w, b) in enumerate(params):
        w_slab = w_slab.at[i, : w.shape[0], : w.shape[1]].set(w)
        b_slab = b_slab.at[i, 0, : b.shape[0]].set(b)
    return w_slab, b_slab


def net_forward(x, w_slab, b_slab, *, tb=256):
    batch = x.shape[0]
    # Batch tile: up to `tb` MXU rows per matmul; shrink (8-aligned) for small batches.
    tb = int(min(tb, max(8, -(-batch // 8) * 8)))
    batch_pad = -(-batch // tb) * tb
    x_pad = jnp.zeros((batch_pad, PAD_IN), jnp.float32).at[:batch, : x.shape[1]].set(x)

    out_pad = pl.pallas_call(
        mlp_kernel,
        out_shape=jax.ShapeDtypeStruct((batch_pad, PAD_OUT), jnp.float32),
        grid_spec=pltpu.PrefetchScalarGridSpec(
            num_scalar_prefetch=0,
            grid=(batch_pad // tb,),
            in_specs=[
                pl.BlockSpec((tb, PAD_IN), lambda i: (i, 0)),                 # activations stream
                pl.BlockSpec((N_LAYERS, PAD_W, PAD_W), lambda i: (0, 0, 0)),  # weights: 1 DMA, resident
                pl.BlockSpec((N_LAYERS, 8, PAD_W), lambda i: (0, 0, 0)),      # biases:  1 DMA, resident
            ],
            out_specs=pl.BlockSpec((tb, PAD_OUT), lambda i: (i, 0)),
        ),
        compiler_params=pltpu.CompilerParams(
            dimension_semantics=("parallel",),   # megacore split of batch tiles on v7x
        ),
    )(x_pad, w_slab, b_slab)
    return out_pad[:batch, :OUT_FEATURES]


def net_forward_ref(x, params):
    """Pure-JAX reference for correctness checking (exact f32 matmuls)."""
    h = x
    for i, (w, b) in enumerate(params):
        h = jnp.dot(h, w, precision=jax.lax.Precision.HIGHEST) + b
        if i < len(params) - 1:
            h = jnp.maximum(h, 0.0)
    return h


if __name__ == "__main__":
    key = jax.random.PRNGKey(0)
    kx, kp, kx2 = jax.random.split(key, 3)

    params = init_params(kp)
    w_slab, b_slab = pack_params(params)   # packed once, reused across calls

    # Small batch (single tile).
    x = jax.random.normal(kx, (8, IN_FEATURES), dtype=jnp.float32)
    out = jax.block_until_ready(net_forward(x, w_slab, b_slab))
    ref = net_forward_ref(x, params)
    assert out.shape == (8, OUT_FEATURES), out.shape
    assert jnp.allclose(out, ref, atol=1e-5, rtol=1e-4), "mismatch vs reference (batch=8)"

    # Larger, non-multiple-of-8 batch: exercises the padding / batch-grid path.
    x2 = jax.random.normal(kx2, (200, IN_FEATURES), dtype=jnp.float32)
    out2 = jax.block_until_ready(net_forward(x2, w_slab, b_slab))
    ref2 = net_forward_ref(x2, params)
    assert out2.shape == (200, OUT_FEATURES), out2.shape
    assert jnp.allclose(out2, ref2, atol=1e-5, rtol=1e-4), "mismatch vs reference (batch=200)"

    print("KERNEL_OK")
</pallas_src>

<mosaic_0001>
module attributes {stable_mosaic.version = 11 : i64} {
  func.func @mlp_kernel(%arg0: i32, %arg1: memref<8x128xf32, #tpu.memory_space<vmem>>, %arg2: memref<6x256x256xf32, #tpu.memory_space<vmem>>, %arg3: memref<6x8x256xf32, #tpu.memory_space<vmem>>, %arg4: memref<8x128xf32, #tpu.memory_space<vmem>>) attributes {dimension_semantics = [#tpu.dimension_semantics<parallel>], iteration_bounds = array<i64: 1>, scalar_prefetch = 0 : i64, scratch_operands = 0 : i64, tpu.core_type = #tpu.core_type<tc>, window_params = [{transform_indices = @transform_0, window_bounds = array<i64: 8, 128>}, {pipeline_mode = #tpu.pipeline_mode<synchronous>, transform_indices = @transform_1, window_bounds = array<i64: 6, 256, 256>}, {pipeline_mode = #tpu.pipeline_mode<synchronous>, transform_indices = @transform_2, window_bounds = array<i64: 6, 8, 256>}, {transform_indices = @transform_3, window_bounds = array<i64: 8, 128>}]} {
    %c0 = arith.constant 0 : index
    %c0_0 = arith.constant 0 : index
    %0 = vector.load %arg1[%c0, %c0_0] : memref<8x128xf32, #tpu.memory_space<vmem>>, vector<8x128xf32>
    %c0_1 = arith.constant 0 : index
    %c0_2 = arith.constant 0 : index
    %c0_3 = arith.constant 0 : index
    %1 = vector.load %arg2[%c0_1, %c0_2, %c0_3] : memref<6x256x256xf32, #tpu.memory_space<vmem>>, vector<1x128x256xf32>
    %2 = vector.shape_cast %1 : vector<1x128x256xf32> to vector<128x256xf32>
    %cst = arith.constant dense<0.000000e+00> : vector<8x256xf32>
    %3 = tpu.matmul %0, %2, %cst {dimension_numbers = #tpu.dot_dimension_numbers<[1], [0], [0], [1], [0, 0, 1, 1], [], []>} : vector<8x128xf32>, vector<128x256xf32>, vector<8x256xf32> -> vector<8x256xf32>
    %c0_4 = arith.constant 0 : index
    %c0_5 = arith.constant 0 : index
    %c0_6 = arith.constant 0 : index
    %4 = vector.load %arg3[%c0_4, %c0_5, %c0_6] : memref<6x8x256xf32, #tpu.memory_space<vmem>>, vector<1x1x256xf32>
    %5 = vector.shape_cast %4 : vector<1x1x256xf32> to vector<1x256xf32>
    %6 = vector.broadcast %5 : vector<1x256xf32> to vector<8x256xf32>
    %7 = arith.addf %3, %6 : vector<8x256xf32>
    %cst_7 = arith.constant 0.000000e+00 : f32
    %8 = vector.broadcast %cst_7 : f32 to vector<8x256xf32>
    %9 = arith.maximumf %7, %8 : vector<8x256xf32>
    %c1 = arith.constant 1 : index
    %c0_8 = arith.constant 0 : index
    %c0_9 = arith.constant 0 : index
    %10 = vector.load %arg2[%c1, %c0_8, %c0_9] : memref<6x256x256xf32, #tpu.memory_space<vmem>>, vector<1x256x256xf32>
    %11 = vector.shape_cast %10 : vector<1x256x256xf32> to vector<256x256xf32>
    %cst_10 = arith.constant dense<0.000000e+00> : vector<8x256xf32>
    %12 = tpu.matmul %9, %11, %cst_10 {dimension_numbers = #tpu.dot_dimension_numbers<[1], [0], [0], [1], [0, 0, 1, 1], [], []>} : vector<8x256xf32>, vector<256x256xf32>, vector<8x256xf32> -> vector<8x256xf32>
    %c1_11 = arith.constant 1 : index
    %c0_12 = arith.constant 0 : index
    %c0_13 = arith.constant 0 : index
    %13 = vector.load %arg3[%c1_11, %c0_12, %c0_13] : memref<6x8x256xf32, #tpu.memory_space<vmem>>, vector<1x1x256xf32>
    %14 = vector.shape_cast %13 : vector<1x1x256xf32> to vector<1x256xf32>
    %15 = vector.broadcast %14 : vector<1x256xf32> to vector<8x256xf32>
    %16 = arith.addf %12, %15 : vector<8x256xf32>
    %cst_14 = arith.constant 0.000000e+00 : f32
    %17 = vector.broadcast %cst_14 : f32 to vector<8x256xf32>
    %18 = arith.maximumf %16, %17 : vector<8x256xf32>
    %c2 = arith.constant 2 : index
    %c0_15 = arith.constant 0 : index
    %c0_16 = arith.constant 0 : index
    %19 = vector.load %arg2[%c2, %c0_15, %c0_16] : memref<6x256x256xf32, #tpu.memory_space<vmem>>, vector<1x256x256xf32>
    %20 = vector.shape_cast %19 : vector<1x256x256xf32> to vector<256x256xf32>
    %cst_17 = arith.constant dense<0.000000e+00> : vector<8x256xf32>
    %21 = tpu.matmul %18, %20, %cst_17 {dimension_numbers = #tpu.dot_dimension_numbers<[1], [0], [0], [1], [0, 0, 1, 1], [], []>} : vector<8x256xf32>, vector<256x256xf32>, vector<8x256xf32> -> vector<8x256xf32>
    %c2_18 = arith.constant 2 : index
    %c0_19 = arith.constant 0 : index
    %c0_20 = arith.constant 0 : index
    %22 = vector.load %arg3[%c2_18, %c0_19, %c0_20] : memref<6x8x256xf32, #tpu.memory_space<vmem>>, vector<1x1x256xf32>
    %23 = vector.shape_cast %22 : vector<1x1x256xf32> to vector<1x256xf32>
    %24 = vector.broadcast %23 : vector<1x256xf32> to vector<8x256xf32>
    %25 = arith.addf %21, %24 : vector<8x256xf32>
    %cst_21 = arith.constant 0.000000e+00 : f32
    %26 = vector.broadcast %cst_21 : f32 to vector<8x256xf32>
    %27 = arith.maximumf %25, %26 : vector<8x256xf32>
    %c3 = arith.constant 3 : index
    %c0_22 = arith.constant 0 : index
    %c0_23 = arith.constant 0 : index
    %28 = vector.load %arg2[%c3, %c0_22, %c0_23] : memref<6x256x256xf32, #tpu.memory_space<vmem>>, vector<1x256x256xf32>
    %29 = vector.shape_cast %28 : vector<1x256x256xf32> to vector<256x256xf32>
    %cst_24 = arith.constant dense<0.000000e+00> : vector<8x256xf32>
    %30 = tpu.matmul %27, %29, %cst_24 {dimension_numbers = #tpu.dot_dimension_numbers<[1], [0], [0], [1], [0, 0, 1, 1], [], []>} : vector<8x256xf32>, vector<256x256xf32>, vector<8x256xf32> -> vector<8x256xf32>
    %c3_25 = arith.constant 3 : index
    %c0_26 = arith.constant 0 : index
    %c0_27 = arith.constant 0 : index
    %31 = vector.load %arg3[%c3_25, %c0_26, %c0_27] : memref<6x8x256xf32, #tpu.memory_space<vmem>>, vector<1x1x256xf32>
    %32 = vector.shape_cast %31 : vector<1x1x256xf32> to vector<1x256xf32>
    %33 = vector.broadcast %32 : vector<1x256xf32> to vector<8x256xf32>
    %34 = arith.addf %30, %33 : vector<8x256xf32>
    %cst_28 = arith.constant 0.000000e+00 : f32
    %35 = vector.broadcast %cst_28 : f32 to vector<8x256xf32>
    %36 = arith.maximumf %34, %35 : vector<8x256xf32>
    %c4 = arith.constant 4 : index
    %c0_29 = arith.constant 0 : index
    %c0_30 = arith.constant 0 : index
    %37 = vector.load %arg2[%c4, %c0_29, %c0_30] : memref<6x256x256xf32, #tpu.memory_space<vmem>>, vector<1x256x256xf32>
    %38 = vector.shape_cast %37 : vector<1x256x256xf32> to vector<256x256xf32>
    %cst_31 = arith.constant dense<0.000000e+00> : vector<8x256xf32>
    %39 = tpu.matmul %36, %38, %cst_31 {dimension_numbers = #tpu.dot_dimension_numbers<[1], [0], [0], [1], [0, 0, 1, 1], [], []>} : vector<8x256xf32>, vector<256x256xf32>, vector<8x256xf32> -> vector<8x256xf32>
    %c4_32 = arith.constant 4 : index
    %c0_33 = arith.constant 0 : index
    %c0_34 = arith.constant 0 : index
    %40 = vector.load %arg3[%c4_32, %c0_33, %c0_34] : memref<6x8x256xf32, #tpu.memory_space<vmem>>, vector<1x1x256xf32>
    %41 = vector.shape_cast %40 : vector<1x1x256xf32> to vector<1x256xf32>
    %42 = vector.broadcast %41 : vector<1x256xf32> to vector<8x256xf32>
    %43 = arith.addf %39, %42 : vector<8x256xf32>
    %cst_35 = arith.constant 0.000000e+00 : f32
    %44 = vector.broadcast %cst_35 : f32 to vector<8x256xf32>
    %45 = arith.maximumf %43, %44 : vector<8x256xf32>
    %c5 = arith.constant 5 : index
    %c0_36 = arith.constant 0 : index
    %c0_37 = arith.constant 0 : index
    %46 = vector.load %arg2[%c5, %c0_36, %c0_37] : memref<6x256x256xf32, #tpu.memory_space<vmem>>, vector<1x256x128xf32>
    %47 = vector.shape_cast %46 : vector<1x256x128xf32> to vector<256x128xf32>
    %cst_38 = arith.constant dense<0.000000e+00> : vector<8x128xf32>
    %48 = tpu.matmul %45, %47, %cst_38 {dimension_numbers = #tpu.dot_dimension_numbers<[1], [0], [0], [1], [0, 0, 1, 1], [], []>} : vector<8x256xf32>, vector<256x128xf32>, vector<8x128xf32> -> vector<8x128xf32>
    %c5_39 = arith.constant 5 : index
    %c0_40 = arith.constant 0 : index
    %c0_41 = arith.constant 0 : index
    %49 = vector.load %arg3[%c5_39, %c0_40, %c0_41] : memref<6x8x256xf32, #tpu.memory_space<vmem>>, vector<1x1x128xf32>
    %50 = vector.shape_cast %49 : vector<1x1x128xf32> to vector<1x128xf32>
    %51 = vector.broadcast %50 : vector<1x128xf32> to vector<8x128xf32>
    %52 = arith.addf %48, %51 : vector<8x128xf32>
    %c0_42 = arith.constant 0 : index
    %c0_43 = arith.constant 0 : index
    %53 = vector.load %arg4[%c0_42, %c0_43] : memref<8x128xf32, #tpu.memory_space<vmem>>, vector<8x128xf32>
    tpu.vector_store %arg4[%c0_42, %c0_43], %52 {strides = array<i32>} : memref<8x128xf32, #tpu.memory_space<vmem>>, vector<8x128xf32>,
    return
  }
  func.func @transform_0(%arg0: i32) -> (i32, i32) {
    %c0_i32 = arith.constant 0 : i32
    %c0_i32_0 = arith.constant 0 : i32
    return %arg0, %c0_i32 : i32, i32
  }
  func.func @transform_1(%arg0: i32) -> (i32, i32, i32) {
    %c0_i32 = arith.constant 0 : i32
    %c0_i32_0 = arith.constant 0 : i32
    %c0_i32_1 = arith.constant 0 : i32
    %c0_i32_2 = arith.constant 0 : i32
    return %c0_i32, %c0_i32_0, %c0_i32_1 : i32, i32, i32
  }
  func.func @transform_2(%arg0: i32) -> (i32, i32, i32) {
    %c0_i32 = arith.constant 0 : i32
    %c0_i32_0 = arith.constant 0 : i32
    %c0_i32_1 = arith.constant 0 : i32
    %c0_i32_2 = arith.constant 0 : i32
    return %c0_i32, %c0_i32_0, %c0_i32_1 : i32, i32, i32
  }
  func.func @transform_3(%arg0: i32) -> (i32, i32) {
    %c0_i32 = arith.constant 0 : i32
    %c0_i32_0 = arith.constant 0 : i32
    return %arg0, %c0_i32 : i32, i32
  }
}

</mosaic_0001>

<llo_original>
// kernel: tpu_custom_call.1
$region0: #{tpu_custom_call.1}
  #allocation0 [shape = 'u32[]', space=smem, size = 0x4, offset = 0x4, fixed_abs, tag = 'smem constant byte address 0x4 - core index']
  #allocation1 [shape = 'u32[72,128]{1,0:T(1,128)}', space=vmem, size = 0x9000, scoped, tag = 'internal scratch']
  %s0 = inlined_call_operand.hbm [shape: f32[8,128], index: 0, kind: input, shape index: {}]
  %s1 = inlined_call_operand.hbm [shape: f32[6,256,256], index: 1, kind: input, shape index: {}]
  %s2 = inlined_call_operand.hbm [shape: f32[6,8,256], index: 2, kind: input, shape index: {}]
  %s3 = inlined_call_operand.hbm [shape: f32[8,128], index: 3, kind: output, shape index: {}]
  %s4 = sld [smem:[#allocation0]]
  $region34: #{tpu_custom_call.1} parent=0
    _
  %s6 = ssub.s32 1, %s4
  %s7 = scalar_select 0, %s6, %s4
  $region1: #{tpu_custom_call.1} parent=0
    #allocation2 [shape = 'u8[4096]{0}', space=vmem, size = 0x1000, scoped, tag = 'input window, operand 0, single buffered']
    #allocation3 [shape = 's32[1]{0}', space=sflag, size = 0x4, scoped, tag = 'scoped memory for tpu_custom_call.1']
    #allocation4 [shape = 's32[1]{0}', space=sflag, size = 0x4, scoped, tag = 'scoped memory for tpu_custom_call.1']
    #allocation5 [shape = 'u8[1572864]{0}', space=vmem, size = 0x180000, scoped, tag = 'input window, operand 1, single buffered']
    #allocation6 [shape = 's32[1]{0}', space=sflag, size = 0x4, scoped, tag = 'scoped memory for tpu_custom_call.1']
    #allocation7 [shape = 'u8[49152]{0}', space=vmem, size = 0xc000, scoped, tag = 'input window, operand 2, single buffered']
    #allocation8 [shape = 'u8[4096]{0}', space=vmem, size = 0x1000, scoped, tag = 'output window, operand 0, single buffered']
    %8 = vsyncpa [#allocation3], 0
    %9 = vsyncpa [#allocation6], 0
    %10 = vsyncpa [#allocation4], 0
    // Predicated region
    $region2: #{tpu_custom_call.1} parent=1 // pred_check
      _
    $region3: #{tpu_custom_call.1} parent=1 // pred_check_branch
      %12 = sbr.rel (0) target = $region5
    $region4: #{tpu_custom_call.1} parent=1 // pred_region
      %14 = vsyncadd [#allocation3], 0
      %s16 = sshll.u32 %s0, 4
      %s17 = int_to_ptr.hbm [resolvable:$true] %s16
      %s18 = sshll.u32 [#allocation2], 4
      %s19 = int_to_ptr.vmem [resolvable:$true] %s18
      %21 = dma.hbm_to_vmem [thread:$0]  %s17, 128, %s19, [#allocation3]
    $region5: #{tpu_custom_call.1} parent=1 // pred_fallthru
      _
    // Predicated region
    $region6: #{tpu_custom_call.1} parent=1 // pred_check
      _
    $region7: #{tpu_custom_call.1} parent=1 // pred_check_branch
      %23 = sbr.rel (0) target = $region9
    $region8: #{tpu_custom_call.1} parent=1 // pred_region
      %25 = vsyncadd [#allocation6], 0
      %s26 = sshll.u32 %s1, 4
      %s27 = int_to_ptr.hbm [resolvable:$true] %s26
      %s28 = sshll.u32 [#allocation5], 4
      %s29 = int_to_ptr.vmem [resolvable:$true] %s28
      %34 = dma.hbm_to_vmem [thread:$0]  %s27, 49152, %s29, [#allocation6], 256, 256, 16
    $region9: #{tpu_custom_call.1} parent=1 // pred_fallthru
      _
    // Predicated region
    $region10: #{tpu_custom_call.1} parent=1 // pred_check
      _
    $region11: #{tpu_custom_call.1} parent=1 // pred_check_branch
      %36 = sbr.rel (0) target = $region13
    $region12: #{tpu_custom_call.1} parent=1 // pred_region
      %38 = vsyncadd [#allocation6], 0
      %s39 = sshll.u32 %s2, 4
      %s40 = int_to_ptr.hbm [resolvable:$true] %s39
      %s41 = sshll.u32 [#allocation7], 4
      %s42 = int_to_ptr.vmem [resolvable:$true] %s41
      %47 = dma.hbm_to_vmem [thread:$0]  %s40, 1536, %s42, [#allocation6], 256, 256, 16
    $region13: #{tpu_custom_call.1} parent=1 // pred_fallthru
      _
    // Predicated region
    $region14: #{tpu_custom_call.1} parent=1 // pred_check
      _
    $region15: #{tpu_custom_call.1} parent=1 // pred_check_branch
      %49 = sbr.rel (0) target = $region17
    $region16: #{tpu_custom_call.1} parent=1 // pred_region
      %51 = dma.done [#allocation3], 128
    $region17: #{tpu_custom_call.1} parent=1 // pred_fallthru
      _
    // Predicated region
    $region18: #{tpu_custom_call.1} parent=1 // pred_check
      _
    $region19: #{tpu_custom_call.1} parent=1 // pred_check_branch
      %53 = sbr.rel (0) target = $region21
    $region20: #{tpu_custom_call.1} parent=1 // pred_region
      %55 = dma.done [#allocation6], 49152
    $region21: #{tpu_custom_call.1} parent=1 // pred_fallthru
      _
    // Predicated region
    $region22: #{tpu_custom_call.1} parent=1 // pred_check
      _
    $region23: #{tpu_custom_call.1} parent=1 // pred_check_branch
      %57 = sbr.rel (0) target = $region25
    $region24: #{tpu_custom_call.1} parent=1 // pred_region
      %59 = dma.done [#allocation6], 1536
    $region25: #{tpu_custom_call.1} parent=1 // pred_fallthru
      _
    %v60 = vld [vmem:[#allocation2] sm:$0xff]
    %v61 = vld [vmem:[#allocation5] sm:$0xff]
    %v62 = vld [vmem:[#allocation5 + $0x8] sm:$0xff]
    %v63 = vld [vmem:[#allocation5 + $0x10] sm:$0xff]
    %v64 = vld [vmem:[#allocation5 + $0x18] sm:$0xff]
    %v65 = vld [vmem:[#allocation5 + $0x20] sm:$0xff]
    %v66 = vld [vmem:[#allocation5 + $0x28] sm:$0xff]
    %v67 = vld [vmem:[#allocation5 + $0x30] sm:$0xff]
    %v68 = vld [vmem:[#allocation5 + $0x38] sm:$0xff]
    %v69 = vld [vmem:[#allocation5 + $0x40] sm:$0xff]
    %v70 = vld [vmem:[#allocation5 + $0x48] sm:$0xff]
    %v71 = vld [vmem:[#allocation5 + $0x50] sm:$0xff]
    %v72 = vld [vmem:[#allocation5 + $0x58] sm:$0xff]
    %v73 = vld [vmem:[#allocation5 + $0x60] sm:$0xff]
    %v74 = vld [vmem:[#allocation5 + $0x68] sm:$0xff]
    %v75 = vld [vmem:[#allocation5 + $0x70] sm:$0xff]
    %v76 = vld [vmem:[#allocation5 + $0x78] sm:$0xff]
    %v77 = vld [vmem:[#allocation5 + $0x80] sm:$0xff]
    %v78 = vld [vmem:[#allocation5 + $0x88] sm:$0xff]
    %v79 = vld [vmem:[#allocation5 + $0x90] sm:$0xff]
    %v80 = vld [vmem:[#allocation5 + $0x98] sm:$0xff]
    %v81 = vld [vmem:[#allocation5 + $0xa0] sm:$0xff]
    %v82 = vld [vmem:[#allocation5 + $0xa8] sm:$0xff]
    %v83 = vld [vmem:[#allocation5 + $0xb0] sm:$0xff]
    %v84 = vld [vmem:[#allocation5 + $0xb8] sm:$0xff]
    %v85 = vld [vmem:[#allocation5 + $0xc0] sm:$0xff]
    %v86 = vld [vmem:[#allocation5 + $0xc8] sm:$0xff]
    %v87 = vld [vmem:[#allocation5 + $0xd0] sm:$0xff]
    %v88 = vld [vmem:[#allocation5 + $0xd8] sm:$0xff]
    %v89 = vld [vmem:[#allocation5 + $0xe0] sm:$0xff]
    %v90 = vld [vmem:[#allocation5 + $0xe8] sm:$0xff]
    %v91 = vld [vmem:[#allocation5 + $0xf0] sm:$0xff]
    %v92 = vld [vmem:[#allocation5 + $0xf8] sm:$0xff]
    %v93 = vld [vmem:[#allocation7] ss:$8 sm:$0x3]
    %v95 = vperm.slane %v93, 0
    %v96 = vperm.slane %v93, 1
    %99 = vmatpush.msra.mxu0 %v91
    %100 = vmatpush.msra.mxu0 %v89
    %101 = vmatpush.msra.mxu0 %v87
    %102 = vmatpush.msra.mxu0 %v85
    %103 = vmatpush.msra.mxu0 %v83
    %104 = vmatpush.msra.mxu0 %v81
    %105 = vmatpush.msra.mxu0 %v79
    %106 = vmatpush.msra.mxu0 %v77
    %107 = vmatpush.msra.mxu0 %v75
    %108 = vmatpush.msra.mxu0 %v73
    %109 = vmatpush.msra.mxu0 %v71
    %110 = vmatpush.msra.mxu0 %v69
    %111 = vmatpush.msra.mxu0 %v67
    %112 = vmatpush.msra.mxu0 %v65
    %113 = vmatpush.msra.mxu0 %v63
    %114 = vmatpush.msra.mxu0 %v61
    %115 = vmatmul.f32.gmra.mxu0 %v60
    %v116 = vpop.f32.mrf.mxu0
    %v117 = vadd.f32 %v95, %v116
    %118 = vdwg.mxu0
    %119 = vmatpush.msra.mxu0 %v92
    %120 = vmatpush.msra.mxu0 %v90
    %121 = vmatpush.msra.mxu0 %v88
    %122 = vmatpush.msra.mxu0 %v86
    %123 = vmatpush.msra.mxu0 %v84
    %124 = vmatpush.msra.mxu0 %v82
    %125 = vmatpush.msra.mxu0 %v80
    %126 = vmatpush.msra.mxu0 %v78
    %127 = vmatpush.msra.mxu0 %v76
    %128 = vmatpush.msra.mxu0 %v74
    %129 = vmatpush.msra.mxu0 %v72
    %130 = vmatpush.msra.mxu0 %v70
    %131 = vmatpush.msra.mxu0 %v68
    %132 = vmatpush.msra.mxu0 %v66
    %133 = vmatpush.msra.mxu0 %v64
    %134 = vmatpush.msra.mxu0 %v62
    %135 = vmatmul.f32.gmra.mxu0 %v60
    %v136 = vpop.f32.mrf.mxu0
    %v137 = vadd.f32 %v96, %v136
    %138 = vdwg.mxu0
    %v139 = vmax.f32 %v117, 0.0
    %v140 = vmax.f32 %v137, 0.0
    %s141 = scalar_lea.vmem [#allocation5], 512
    %v142 = vld [vmem:[%s141] sm:$0xff]
    %v143 = vld [vmem:[%s141 + $0x8] sm:$0xff]
    %v144 = vld [vmem:[%s141 + $0x10] sm:$0xff]
    %v145 = vld [vmem:[%s141 + $0x18] sm:$0xff]
    %v146 = vld [vmem:[%s141 + $0x20] sm:$0xff]
    %v147 = vld [vmem:[%s141 + $0x28] sm:$0xff]
    %v148 = vld [vmem:[%s141 + $0x30] sm:$0xff]
    %v149 = vld [vmem:[%s141 + $0x38] sm:$0xff]
    %v150 = vld [vmem:[%s141 + $0x40] sm:$0xff]
    %v151 = vld [vmem:[%s141 + $0x48] sm:$0xff]
    %v152 = vld [vmem:[%s141 + $0x50] sm:$0xff]
    %v153 = vld [vmem:[%s141 + $0x58] sm:$0xff]
    %v154 = vld [vmem:[%s141 + $0x60] sm:$0xff]
    %v155 = vld [vmem:[%s141 + $0x68] sm:$0xff]
    %v156 = vld [vmem:[%s141 + $0x70] sm:$0xff]
    %v157 = vld [vmem:[%s141 + $0x78] sm:$0xff]
    %v158 = vld [vmem:[%s141 + $0x80] sm:$0xff]
    %v159 = vld [vmem:[%s141 + $0x88] sm:$0xff]
    %v160 = vld [vmem:[%s141 + $0x90] sm:$0xff]
    %v161 = vld [vmem:[%s141 + $0x98] sm:$0xff]
    %v162 = vld [vmem:[%s141 + $0xa0] sm:$0xff]
    %v163 = vld [vmem:[%s141 + $0xa8] sm:$0xff]
    %v164 = vld [vmem:[%s141 + $0xb0] sm:$0xff]
    %v165 = vld [vmem:[%s141 + $0xb8] sm:$0xff]
    %v166 = vld [vmem:[%s141 + $0xc0] sm:$0xff]
    %v167 = vld [vmem:[%s141 + $0xc8] sm:$0xff]
    %v168 = vld [vmem:[%s141 + $0xd0] sm:$0xff]
    %v169 = vld [vmem:[%s141 + $0xd8] sm:$0xff]
    %v170 = vld [vmem:[%s141 + $0xe0] sm:$0xff]
    %v171 = vld [vmem:[%s141 + $0xe8] sm:$0xff]
    %v172 = vld [vmem:[%s141 + $0xf0] sm:$0xff]
    %v173 = vld [vmem:[%s141 + $0xf8] sm:$0xff]
    %v174 = vld [vmem:[%s141 + $0x100] sm:$0xff]
    %v175 = vld [vmem:[%s141 + $0x108] sm:$0xff]
    %v176 = vld [vmem:[%s141 + $0x110] sm:$0xff]
    %v177 = vld [vmem:[%s141 + $0x118] sm:$0xff]
    %v178 = vld [vmem:[%s141 + $0x120] sm:$0xff]
    %v179 = vld [vmem:[%s141 + $0x128] sm:$0xff]
    %v180 = vld [vmem:[%s141 + $0x130] sm:$0xff]
    %v181 = vld [vmem:[%s141 + $0x138] sm:$0xff]
    %v182 = vld [vmem:[%s141 + $0x140] sm:$0xff]
    %v183 = vld [vmem:[%s141 + $0x148] sm:$0xff]
    %v184 = vld [vmem:[%s141 + $0x150] sm:$0xff]
    %v185 = vld [vmem:[%s141 + $0x158] sm:$0xff]
    %v186 = vld [vmem:[%s141 + $0x160] sm:$0xff]
    %v187 = vld [vmem:[%s141 + $0x168] sm:$0xff]
    %v188 = vld [vmem:[%s141 + $0x170] sm:$0xff]
    %v189 = vld [vmem:[%s141 + $0x178] sm:$0xff]
    %v190 = vld [vmem:[%s141 + $0x180] sm:$0xff]
    %v191 = vld [vmem:[%s141 + $0x188] sm:$0xff]
    %v192 = vld [vmem:[%s141 + $0x190] sm:$0xff]
    %v193 = vld [vmem:[%s141 + $0x198] sm:$0xff]
    %v194 = vld [vmem:[%s141 + $0x1a0] sm:$0xff]
    %v195 = vld [vmem:[%s141 + $0x1a8] sm:$0xff]
    %v196 = vld [vmem:[%s141 + $0x1b0] sm:$0xff]
    %v197 = vld [vmem:[%s141 + $0x1b8] sm:$0xff]
    %v198 = vld [vmem:[%s141 + $0x1c0] sm:$0xff]
    %v199 = vld [vmem:[%s141 + $0x1c8] sm:$0xff]
    %v200 = vld [vmem:[%s141 + $0x1d0] sm:$0xff]
    %v201 = vld [vmem:[%s141 + $0x1d8] sm:$0xff]
    %v202 = vld [vmem:[%s141 + $0x1e0] sm:$0xff]
    %v203 = vld [vmem:[%s141 + $0x1e8] sm:$0xff]
    %v204 = vld [vmem:[%s141 + $0x1f0] sm:$0xff]
    %v205 = vld [vmem:[%s141 + $0x1f8] sm:$0xff]
    %s206 = scalar_lea.vmem [#allocation7], 16
    %v207 = vld [vmem:[%s206] ss:$8 sm:$0x3]
    %v209 = vperm.slane %v207, 0
    %v210 = vperm.slane %v207, 1
    %213 = vmatpush.msra.mxu0 %v172
    %214 = vmatpush.msra.mxu0 %v170
    %215 = vmatpush.msra.mxu0 %v168
    %216 = vmatpush.msra.mxu0 %v166
    %217 = vmatpush.msra.mxu0 %v164
    %218 = vmatpush.msra.mxu0 %v162
    %219 = vmatpush.msra.mxu0 %v160
    %220 = vmatpush.msra.mxu0 %v158
    %221 = vmatpush.msra.mxu0 %v156
    %222 = vmatpush.msra.mxu0 %v154
    %223 = vmatpush.msra.mxu0 %v152
    %224 = vmatpush.msra.mxu0 %v150
    %225 = vmatpush.msra.mxu0 %v148
    %226 = vmatpush.msra.mxu0 %v146
    %227 = vmatpush.msra.mxu0 %v144
    %228 = vmatpush.msra.mxu0 %v142
    %229 = vmatmul.f32.gmra.mxu0 %v139
    %v230 = vpop.f32.mrf.mxu0
    %v231 = vadd.f32 %v209, %v230
    %232 = vdwg.mxu0
    %233 = vmatpush.msra.mxu0 %v204
    %234 = vmatpush.msra.mxu0 %v202
    %235 = vmatpush.msra.mxu0 %v200
    %236 = vmatpush.msra.mxu0 %v198
    %237 = vmatpush.msra.mxu0 %v196
    %238 = vmatpush.msra.mxu0 %v194
    %239 = vmatpush.msra.mxu0 %v192
    %240 = vmatpush.msra.mxu0 %v190
    %241 = vmatpush.msra.mxu0 %v188
    %242 = vmatpush.msra.mxu0 %v186
    %243 = vmatpush.msra.mxu0 %v184
    %244 = vmatpush.msra.mxu0 %v182
    %245 = vmatpush.msra.mxu0 %v180
    %246 = vmatpush.msra.mxu0 %v178
    %247 = vmatpush.msra.mxu0 %v176
    %248 = vmatpush.msra.mxu0 %v174
    %249 = vmatmul.f32.gmra.mxu0 %v140
    %v250 = vpop.f32.mrf.mxu0
    %v251 = vadd.f32 %v231, %v250
    %252 = vdwg.mxu0
    %253 = vmatpush.msra.mxu0 %v173
    %254 = vmatpush.msra.mxu0 %v171
    %255 = vmatpush.msra.mxu0 %v169
    %256 = vmatpush.msra.mxu0 %v167
    %257 = vmatpush.msra.mxu0 %v165
    %258 = vmatpush.msra.mxu0 %v163
    %259 = vmatpush.msra.mxu0 %v161
    %260 = vmatpush.msra.mxu0 %v159
    %261 = vmatpush.msra.mxu0 %v157
    %262 = vmatpush.msra.mxu0 %v155
    %263 = vmatpush.msra.mxu0 %v153
    %264 = vmatpush.msra.mxu0 %v151
    %265 = vmatpush.msra.mxu0 %v149
    %266 = vmatpush.msra.mxu0 %v147
    %267 = vmatpush.msra.mxu0 %v145
    %268 = vmatpush.msra.mxu0 %v143
    %269 = vmatmul.f32.gmra.mxu0 %v139
    %v270 = vpop.f32.mrf.mxu0
    %v271 = vadd.f32 %v210, %v270
    %272 = vdwg.mxu0
    %273 = vmatpush.msra.mxu0 %v205
    %274 = vmatpush.msra.mxu0 %v203
    %275 = vmatpush.msra.mxu0 %v201
    %276 = vmatpush.msra.mxu0 %v199
    %277 = vmatpush.msra.mxu0 %v197
    %278 = vmatpush.msra.mxu0 %v195
    %279 = vmatpush.msra.mxu0 %v193
    %280 = vmatpush.msra.mxu0 %v191
    %281 = vmatpush.msra.mxu0 %v189
    %282 = vmatpush.msra.mxu0 %v187
    %283 = vmatpush.msra.mxu0 %v185
    %284 = vmatpush.msra.mxu0 %v183
    %285 = vmatpush.msra.mxu0 %v181
    %286 = vmatpush.msra.mxu0 %v179
    %287 = vmatpush.msra.mxu0 %v177
    %288 = vmatpush.msra.mxu0 %v175
    %289 = vmatmul.f32.gmra.mxu0 %v140
    %v290 = vpop.f32.mrf.mxu0
    %v291 = vadd.f32 %v271, %v290
    %292 = vdwg.mxu0
    %v293 = vmax.f32 %v251, 0.0
    %v294 = vmax.f32 %v291, 0.0
    %s295 = scalar_lea.vmem [#allocation5], 1024
    %v296 = vld [vmem:[%s295] sm:$0xff]
    %v297 = vld [vmem:[%s295 + $0x8] sm:$0xff]
    %v298 = vld [vmem:[%s295 + $0x10] sm:$0xff]
    %v299 = vld [vmem:[%s295 + $0x18] sm:$0xff]
    %v300 = vld [vmem:[%s295 + $0x20] sm:$0xff]
    %v301 = vld [vmem:[%s295 + $0x28] sm:$0xff]
    %v302 = vld [vmem:[%s295 + $0x30] sm:$0xff]
    %v303 = vld [vmem:[%s295 + $0x38] sm:$0xff]
    %v304 = vld [vmem:[%s295 + $0x40] sm:$0xff]
    %v305 = vld [vmem:[%s295 + $0x48] sm:$0xff]
    %v306 = vld [vmem:[%s295 + $0x50] sm:$0xff]
    %v307 = vld [vmem:[%s295 + $0x58] sm:$0xff]
    %v308 = vld [vmem:[%s295 + $0x60] sm:$0xff]
    %v309 = vld [vmem:[%s295 + $0x68] sm:$0xff]
    %v310 = vld [vmem:[%s295 + $0x70] sm:$0xff]
    %v311 = vld [vmem:[%s295 + $0x78] sm:$0xff]
    %v312 = vld [vmem:[%s295 + $0x80] sm:$0xff]
    %v313 = vld [vmem:[%s295 + $0x88] sm:$0xff]
    %v314 = vld [vmem:[%s295 + $0x90] sm:$0xff]
    %v315 = vld [vmem:[%s295 + $0x98] sm:$0xff]
    %v316 = vld [vmem:[%s295 + $0xa0] sm:$0xff]
    %v317 = vld [vmem:[%s295 + $0xa8] sm:$0xff]
    %v318 = vld [vmem:[%s295 + $0xb0] sm:$0xff]
    %v319 = vld [vmem:[%s295 + $0xb8] sm:$0xff]
    %v320 = vld [vmem:[%s295 + $0xc0] sm:$0xff]
    %v321 = vld [vmem:[%s295 + $0xc8] sm:$0xff]
    %v322 = vld [vmem:[%s295 + $0xd0] sm:$0xff]
    %v323 = vld [vmem:[%s295 + $0xd8] sm:$0xff]
    %v324 = vld [vmem:[%s295 + $0xe0] sm:$0xff]
    %v325 = vld [vmem:[%s295 + $0xe8] sm:$0xff]
    %v326 = vld [vmem:[%s295 + $0xf0] sm:$0xff]
    %v327 = vld [vmem:[%s295 + $0xf8] sm:$0xff]
    %v328 = vld [vmem:[%s295 + $0x100] sm:$0xff]
    %v329 = vld [vmem:[%s295 + $0x108] sm:$0xff]
    %v330 = vld [vmem:[%s295 + $0x110] sm:$0xff]
    %v331 = vld [vmem:[%s295 + $0x118] sm:$0xff]
    %v332 = vld [vmem:[%s295 + $0x120] sm:$0xff]
    %v333 = vld [vmem:[%s295 + $0x128] sm:$0xff]
    %v334 = vld [vmem:[%s295 + $0x130] sm:$0xff]
    %v335 = vld [vmem:[%s295 + $0x138] sm:$0xff]
    %v336 = vld [vmem:[%s295 + $0x140] sm:$0xff]
    %v337 = vld [vmem:[%s295 + $0x148] sm:$0xff]
    %v338 = vld [vmem:[%s295 + $0x150] sm:$0xff]
    %v339 = vld [vmem:[%s295 + $0x158] sm:$0xff]
    %v340 = vld [vmem:[%s295 + $0x160] sm:$0xff]
    %v341 = vld [vmem:[%s295 + $0x168] sm:$0xff]
    %v342 = vld [vmem:[%s295 + $0x170] sm:$0xff]
    %v343 = vld [vmem:[%s295 + $0x178] sm:$0xff]
    %v344 = vld [vmem:[%s295 + $0x180] sm:$0xff]
    %v345 = vld [vmem:[%s295 + $0x188] sm:$0xff]
    %v346 = vld [vmem:[%s295 + $0x190] sm:$0xff]
    %v347 = vld [vmem:[%s295 + $0x198] sm:$0xff]
    %v348 = vld [vmem:[%s295 + $0x1a0] sm:$0xff]
    %v349 = vld [vmem:[%s295 + $0x1a8] sm:$0xff]
    %v350 = vld [vmem:[%s295 + $0x1b0] sm:$0xff]
    %v351 = vld [vmem:[%s295 + $0x1b8] sm:$0xff]
    %v352 = vld [vmem:[%s295 + $0x1c0] sm:$0xff]
    %v353 = vld [vmem:[%s295 + $0x1c8] sm:$0xff]
    %v354 = vld [vmem:[%s295 + $0x1d0] sm:$0xff]
    %v355 = vld [vmem:[%s295 + $0x1d8] sm:$0xff]
    %v356 = vld [vmem:[%s295 + $0x1e0] sm:$0xff]
    %v357 = vld [vmem:[%s295 + $0x1e8] sm:$0xff]
    %v358 = vld [vmem:[%s295 + $0x1f0] sm:$0xff]
    %v359 = vld [vmem:[%s295 + $0x1f8] sm:$0xff]
    %s360 = scalar_lea.vmem [#allocation7], 32
    %v361 = vld [vmem:[%s360] ss:$8 sm:$0x3]
    %v363 = vperm.slane %v361, 0
    %v364 = vperm.slane %v361, 1
    %367 = vmatpush.msra.mxu0 %v326
    %368 = vmatpush.msra.mxu0 %v324
    %369 = vmatpush.msra.mxu0 %v322
    %370 = vmatpush.msra.mxu0 %v320
    %371 = vmatpush.msra.mxu0 %v318
    %372 = vmatpush.msra.mxu0 %v316
    %373 = vmatpush.msra.mxu0 %v314
    %374 = vmatpush.msra.mxu0 %v312
    %375 = vmatpush.msra.mxu0 %v310
    %376 = vmatpush.msra.mxu0 %v308
    %377 = vmatpush.msra.mxu0 %v306
    %378 = vmatpush.msra.mxu0 %v304
    %379 = vmatpush.msra.mxu0 %v302
    %380 = vmatpush.msra.mxu0 %v300
    %381 = vmatpush.msra.mxu0 %v298
    %382 = vmatpush.msra.mxu0 %v296
    %383 = vmatmul.f32.gmra.mxu0 %v293
    %v384 = vpop.f32.mrf.mxu0
    %v385 = vadd.f32 %v363, %v384
    %386 = vdwg.mxu0
    %387 = vmatpush.msra.mxu0 %v358
    %388 = vmatpush.msra.mxu0 %v356
    %389 = vmatpush.msra.mxu0 %v354
    %390 = vmatpush.msra.mxu0 %v352
    %391 = vmatpush.msra.mxu0 %v350
    %392 = vmatpush.msra.mxu0 %v348
    %393 = vmatpush.msra.mxu0 %v346
    %394 = vmatpush.msra.mxu0 %v344
    %395 = vmatpush.msra.mxu0 %v342
    %396 = vmatpush.msra.mxu0 %v340
    %397 = vmatpush.msra.mxu0 %v338
    %398 = vmatpush.msra.mxu0 %v336
    %399 = vmatpush.msra.mxu0 %v334
    %400 = vmatpush.msra.mxu0 %v332
    %401 = vmatpush.msra.mxu0 %v330
    %402 = vmatpush.msra.mxu0 %v328
    %403 = vmatmul.f32.gmra.mxu0 %v294
    %v404 = vpop.f32.mrf.mxu0
    %v405 = vadd.f32 %v385, %v404
    %406 = vdwg.mxu0
    %407 = vmatpush.msra.mxu0 %v327
    %408 = vmatpush.msra.mxu0 %v325
    %409 = vmatpush.msra.mxu0 %v323
    %410 = vmatpush.msra.mxu0 %v321
    %411 = vmatpush.msra.mxu0 %v319
    %412 = vmatpush.msra.mxu0 %v317
    %413 = vmatpush.msra.mxu0 %v315
    %414 = vmatpush.msra.mxu0 %v313
    %415 = vmatpush.msra.mxu0 %v311
    %416 = vmatpush.msra.mxu0 %v309
    %417 = vmatpush.msra.mxu0 %v307
    %418 = vmatpush.msra.mxu0 %v305
    %419 = vmatpush.msra.mxu0 %v303
    %420 = vmatpush.msra.mxu0 %v301
    %421 = vmatpush.msra.mxu0 %v299
    %422 = vmatpush.msra.mxu0 %v297
    %423 = vmatmul.f32.gmra.mxu0 %v293
    %v424 = vpop.f32.mrf.mxu0
    %v425 = vadd.f32 %v364, %v424
    %426 = vdwg.mxu0
    %427 = vmatpush.msra.mxu0 %v359
    %428 = vmatpush.msra.mxu0 %v357
    %429 = vmatpush.msra.mxu0 %v355
    %430 = vmatpush.msra.mxu0 %v353
    %431 = vmatpush.msra.mxu0 %v351
    %432 = vmatpush.msra.mxu0 %v349
    %433 = vmatpush.msra.mxu0 %v347
    %434 = vmatpush.msra.mxu0 %v345
    %435 = vmatpush.msra.mxu0 %v343
    %436 = vmatpush.msra.mxu0 %v341
    %437 = vmatpush.msra.mxu0 %v339
    %438 = vmatpush.msra.mxu0 %v337
    %439 = vmatpush.msra.mxu0 %v335
    %440 = vmatpush.msra.mxu0 %v333
    %441 = vmatpush.msra.mxu0 %v331
    %442 = vmatpush.msra.mxu0 %v329
    %443 = vmatmul.f32.gmra.mxu0 %v294
    %v444 = vpop.f32.mrf.mxu0
    %v445 = vadd.f32 %v425, %v444
    %446 = vdwg.mxu0
    %v447 = vmax.f32 %v405, 0.0
    %v448 = vmax.f32 %v445, 0.0
    %s449 = scalar_lea.vmem [#allocation5], 1536
    %v450 = vld [vmem:[%s449] sm:$0xff]
    %v451 = vld [vmem:[%s449 + $0x8] sm:$0xff]
    %v452 = vld [vmem:[%s449 + $0x10] sm:$0xff]
    %v453 = vld [vmem:[%s449 + $0x18] sm:$0xff]
    %v454 = vld [vmem:[%s449 + $0x20] sm:$0xff]
    %v455 = vld [vmem:[%s449 + $0x28] sm:$0xff]
    %v456 = vld [vmem:[%s449 + $0x30] sm:$0xff]
    %v457 = vld [vmem:[%s449 + $0x38] sm:$0xff]
    %v458 = vld [vmem:[%s449 + $0x40] sm:$0xff]
    %v459 = vld [vmem:[%s449 + $0x48] sm:$0xff]
    %v460 = vld [vmem:[%s449 + $0x50] sm:$0xff]
    %v461 = vld [vmem:[%s449 + $0x58] sm:$0xff]
    %v462 = vld [vmem:[%s449 + $0x60] sm:$0xff]
    %v463 = vld [vmem:[%s449 + $0x68] sm:$0xff]
    %v464 = vld [vmem:[%s449 + $0x70] sm:$0xff]
    %v465 = vld [vmem:[%s449 + $0x78] sm:$0xff]
    %v466 = vld [vmem:[%s449 + $0x80] sm:$0xff]
    %v467 = vld [vmem:[%s449 + $0x88] sm:$0xff]
    %v468 = vld [vmem:[%s449 + $0x90] sm:$0xff]
    %v469 = vld [vmem:[%s449 + $0x98] sm:$0xff]
    %v470 = vld [vmem:[%s449 + $0xa0] sm:$0xff]
    %v471 = vld [vmem:[%s449 + $0xa8] sm:$0xff]
    %v472 = vld [vmem:[%s449 + $0xb0] sm:$0xff]
    %v473 = vld [vmem:[%s449 + $0xb8] sm:$0xff]
    %v474 = vld [vmem:[%s449 + $0xc0] sm:$0xff]
    %v475 = vld [vmem:[%s449 + $0xc8] sm:$0xff]
    %v476 = vld [vmem:[%s449 + $0xd0] sm:$0xff]
    %v477 = vld [vmem:[%s449 + $0xd8] sm:$0xff]
    %v478 = vld [vmem:[%s449 + $0xe0] sm:$0xff]
    %v479 = vld [vmem:[%s449 + $0xe8] sm:$0xff]
    %v480 = vld [vmem:[%s449 + $0xf0] sm:$0xff]
    %v481 = vld [vmem:[%s449 + $0xf8] sm:$0xff]
    %v482 = vld [vmem:[%s449 + $0x100] sm:$0xff]
    %v483 = vld [vmem:[%s449 + $0x108] sm:$0xff]
    %v484 = vld [vmem:[%s449 + $0x110] sm:$0xff]
    %v485 = vld [vmem:[%s449 + $0x118] sm:$0xff]
    %v486 = vld [vmem:[%s449 + $0x120] sm:$0xff]
    %v487 = vld [vmem:[%s449 + $0x128] sm:$0xff]
    %v488 = vld [vmem:[%s449 + $0x130] sm:$0xff]
    %v489 = vld [vmem:[%s449 + $0x138] sm:$0xff]
    %v490 = vld [vmem:[%s449 + $0x140] sm:$0xff]
    %v491 = vld [vmem:[%s449 + $0x148] sm:$0xff]
    %v492 = vld [vmem:[%s449 + $0x150] sm:$0xff]
    %v493 = vld [vmem:[%s449 + $0x158] sm:$0xff]
    %v494 = vld [vmem:[%s449 + $0x160] sm:$0xff]
    %v495 = vld [vmem:[%s449 + $0x168] sm:$0xff]
    %v496 = vld [vmem:[%s449 + $0x170] sm:$0xff]
    %v497 = vld [vmem:[%s449 + $0x178] sm:$0xff]
    %v498 = vld [vmem:[%s449 + $0x180] sm:$0xff]
    %v499 = vld [vmem:[%s449 + $0x188] sm:$0xff]
    %v500 = vld [vmem:[%s449 + $0x190] sm:$0xff]
    %v501 = vld [vmem:[%s449 + $0x198] sm:$0xff]
    %v502 = vld [vmem:[%s449 + $0x1a0] sm:$0xff]
    %v503 = vld [vmem:[%s449 + $0x1a8] sm:$0xff]
    %v504 = vld [vmem:[%s449 + $0x1b0] sm:$0xff]
    %v505 = vld [vmem:[%s449 + $0x1b8] sm:$0xff]
    %v506 = vld [vmem:[%s449 + $0x1c0] sm:$0xff]
    %v507 = vld [vmem:[%s449 + $0x1c8] sm:$0xff]
    %v508 = vld [vmem:[%s449 + $0x1d0] sm:$0xff]
    %v509 = vld [vmem:[%s449 + $0x1d8] sm:$0xff]
    %v510 = vld [vmem:[%s449 + $0x1e0] sm:$0xff]
    %v511 = vld [vmem:[%s449 + $0x1e8] sm:$0xff]
    %v512 = vld [vmem:[%s449 + $0x1f0] sm:$0xff]
    %v513 = vld [vmem:[%s449 + $0x1f8] sm:$0xff]
    %s514 = scalar_lea.vmem [#allocation7], 48
    %v515 = vld [vmem:[%s514] ss:$8 sm:$0x3]
    %v517 = vperm.slane %v515, 0
    %v518 = vperm.slane %v515, 1
    %521 = vmatpush.msra.mxu0 %v480
    %522 = vmatpush.msra.mxu0 %v478
    %523 = vmatpush.msra.mxu0 %v476
    %524 = vmatpush.msra.mxu0 %v474
    %525 = vmatpush.msra.mxu0 %v472
    %526 = vmatpush.msra.mxu0 %v470
    %527 = vmatpush.msra.mxu0 %v468
    %528 = vmatpush.msra.mxu0 %v466
    %529 = vmatpush.msra.mxu0 %v464
    %530 = vmatpush.msra.mxu0 %v462
    %531 = vmatpush.msra.mxu0 %v460
    %532 = vmatpush.msra.mxu0 %v458
    %533 = vmatpush.msra.mxu0 %v456
    %534 = vmatpush.msra.mxu0 %v454
    %535 = vmatpush.msra.mxu0 %v452
    %536 = vmatpush.msra.mxu0 %v450
    %537 = vmatmul.f32.gmra.mxu0 %v447
    %v538 = vpop.f32.mrf.mxu0
    %v539 = vadd.f32 %v517, %v538
    %540 = vdwg.mxu0
    %541 = vmatpush.msra.mxu0 %v512
    %542 = vmatpush.msra.mxu0 %v510
    %543 = vmatpush.msra.mxu0 %v508
    %544 = vmatpush.msra.mxu0 %v506
    %545 = vmatpush.msra.mxu0 %v504
    %546 = vmatpush.msra.mxu0 %v502
    %547 = vmatpush.msra.mxu0 %v500
    %548 = vmatpush.msra.mxu0 %v498
    %549 = vmatpush.msra.mxu0 %v496
    %550 = vmatpush.msra.mxu0 %v494
    %551 = vmatpush.msra.mxu0 %v492
    %552 = vmatpush.msra.mxu0 %v490
    %553 = vmatpush.msra.mxu0 %v488
    %554 = vmatpush.msra.mxu0 %v486
    %555 = vmatpush.msra.mxu0 %v484
    %556 = vmatpush.msra.mxu0 %v482
    %557 = vmatmul.f32.gmra.mxu0 %v448
    %v558 = vpop.f32.mrf.mxu0
    %v559 = vadd.f32 %v539, %v558
    %560 = vdwg.mxu0
    %561 = vmatpush.msra.mxu0 %v481
    %562 = vmatpush.msra.mxu0 %v479
    %563 = vmatpush.msra.mxu0 %v477
    %564 = vmatpush.msra.mxu0 %v475
    %565 = vmatpush.msra.mxu0 %v473
    %566 = vmatpush.msra.mxu0 %v471
    %567 = vmatpush.msra.mxu0 %v469
    %568 = vmatpush.msra.mxu0 %v467
    %569 = vmatpush.msra.mxu0 %v465
    %570 = vmatpush.msra.mxu0 %v463
    %571 = vmatpush.msra.mxu0 %v461
    %572 = vmatpush.msra.mxu0 %v459
    %573 = vmatpush.msra.mxu0 %v457
    %574 = vmatpush.msra.mxu0 %v455
    %575 = vmatpush.msra.mxu0 %v453
    %576 = vmatpush.msra.mxu0 %v451
    %577 = vmatmul.f32.gmra.mxu0 %v447
    %v578 = vpop.f32.mrf.mxu0
    %v579 = vadd.f32 %v518, %v578
    %580 = vdwg.mxu0
    %581 = vmatpush.msra.mxu0 %v513
    %582 = vmatpush.msra.mxu0 %v511
    %583 = vmatpush.msra.mxu0 %v509
    %584 = vmatpush.msra.mxu0 %v507
    %585 = vmatpush.msra.mxu0 %v505
    %586 = vmatpush.msra.mxu0 %v503
    %587 = vmatpush.msra.mxu0 %v501
    %588 = vmatpush.msra.mxu0 %v499
    %589 = vmatpush.msra.mxu0 %v497
    %590 = vmatpush.msra.mxu0 %v495
    %591 = vmatpush.msra.mxu0 %v493
    %592 = vmatpush.msra.mxu0 %v491
    %593 = vmatpush.msra.mxu0 %v489
    %594 = vmatpush.msra.mxu0 %v487
    %595 = vmatpush.msra.mxu0 %v485
    %596 = vmatpush.msra.mxu0 %v483
    %597 = vmatmul.f32.gmra.mxu0 %v448
    %v598 = vpop.f32.mrf.mxu0
    %v599 = vadd.f32 %v579, %v598
    %600 = vdwg.mxu0
    %v601 = vmax.f32 %v559, 0.0
    %v602 = vmax.f32 %v599, 0.0
    %s603 = scalar_lea.vmem [#allocation5], 2048
    %v604 = vld [vmem:[%s603] sm:$0xff]
    %v605 = vld [vmem:[%s603 + $0x8] sm:$0xff]
    %v606 = vld [vmem:[%s603 + $0x10] sm:$0xff]
    %v607 = vld [vmem:[%s603 + $0x18] sm:$0xff]
    %v608 = vld [vmem:[%s603 + $0x20] sm:$0xff]
    %v609 = vld [vmem:[%s603 + $0x28] sm:$0xff]
    %v610 = vld [vmem:[%s603 + $0x30] sm:$0xff]
    %v611 = vld [vmem:[%s603 + $0x38] sm:$0xff]
    %v612 = vld [vmem:[%s603 + $0x40] sm:$0xff]
    %v613 = vld [vmem:[%s603 + $0x48] sm:$0xff]
    %v614 = vld [vmem:[%s603 + $0x50] sm:$0xff]
    %v615 = vld [vmem:[%s603 + $0x58] sm:$0xff]
    %v616 = vld [vmem:[%s603 + $0x60] sm:$0xff]
    %v617 = vld [vmem:[%s603 + $0x68] sm:$0xff]
    %v618 = vld [vmem:[%s603 + $0x70] sm:$0xff]
    %v619 = vld [vmem:[%s603 + $0x78] sm:$0xff]
    %v620 = vld [vmem:[%s603 + $0x80] sm:$0xff]
    %v621 = vld [vmem:[%s603 + $0x88] sm:$0xff]
    %v622 = vld [vmem:[%s603 + $0x90] sm:$0xff]
    %v623 = vld [vmem:[%s603 + $0x98] sm:$0xff]
    %v624 = vld [vmem:[%s603 + $0xa0] sm:$0xff]
    %v625 = vld [vmem:[%s603 + $0xa8] sm:$0xff]
    %v626 = vld [vmem:[%s603 + $0xb0] sm:$0xff]
    %v627 = vld [vmem:[%s603 + $0xb8] sm:$0xff]
    %v628 = vld [vmem:[%s603 + $0xc0] sm:$0xff]
    %v629 = vld [vmem:[%s603 + $0xc8] sm:$0xff]
    %v630 = vld [vmem:[%s603 + $0xd0] sm:$0xff]
    %v631 = vld [vmem:[%s603 + $0xd8] sm:$0xff]
    %v632 = vld [vmem:[%s603 + $0xe0] sm:$0xff]
    %v633 = vld [vmem:[%s603 + $0xe8] sm:$0xff]
    %v634 = vld [vmem:[%s603 + $0xf0] sm:$0xff]
    %v635 = vld [vmem:[%s603 + $0xf8] sm:$0xff]
    %v636 = vld [vmem:[%s603 + $0x100] sm:$0xff]
    %v637 = vld [vmem:[%s603 + $0x108] sm:$0xff]
    %v638 = vld [vmem:[%s603 + $0x110] sm:$0xff]
    %v639 = vld [vmem:[%s603 + $0x118] sm:$0xff]
    %v640 = vld [vmem:[%s603 + $0x120] sm:$0xff]
    %v641 = vld [vmem:[%s603 + $0x128] sm:$0xff]
    %v642 = vld [vmem:[%s603 + $0x130] sm:$0xff]
    %v643 = vld [vmem:[%s603 + $0x138] sm:$0xff]
    %v644 = vld [vmem:[%s603 + $0x140] sm:$0xff]
    %v645 = vld [vmem:[%s603 + $0x148] sm:$0xff]
    %v646 = vld [vmem:[%s603 + $0x150] sm:$0xff]
    %v647 = vld [vmem:[%s603 + $0x158] sm:$0xff]
    %v648 = vld [vmem:[%s603 + $0x160] sm:$0xff]
    %v649 = vld [vmem:[%s603 + $0x168] sm:$0xff]
    %v650 = vld [vmem:[%s603 + $0x170] sm:$0xff]
    %v651 = vld [vmem:[%s603 + $0x178] sm:$0xff]
    %v652 = vld [vmem:[%s603 + $0x180] sm:$0xff]
    %v653 = vld [vmem:[%s603 + $0x188] sm:$0xff]
    %v654 = vld [vmem:[%s603 + $0x190] sm:$0xff]
    %v655 = vld [vmem:[%s603 + $0x198] sm:$0xff]
    %v656 = vld [vmem:[%s603 + $0x1a0] sm:$0xff]
    %v657 = vld [vmem:[%s603 + $0x1a8] sm:$0xff]
    %v658 = vld [vmem:[%s603 + $0x1b0] sm:$0xff]
    %v659 = vld [vmem:[%s603 + $0x1b8] sm:$0xff]
    %v660 = vld [vmem:[%s603 + $0x1c0] sm:$0xff]
    %v661 = vld [vmem:[%s603 + $0x1c8] sm:$0xff]
    %v662 = vld [vmem:[%s603 + $0x1d0] sm:$0xff]
    %v663 = vld [vmem:[%s603 + $0x1d8] sm:$0xff]
    %v664 = vld [vmem:[%s603 + $0x1e0] sm:$0xff]
    %v665 = vld [vmem:[%s603 + $0x1e8] sm:$0xff]
    %v666 = vld [vmem:[%s603 + $0x1f0] sm:$0xff]
    %v667 = vld [vmem:[%s603 + $0x1f8] sm:$0xff]
    %s668 = scalar_lea.vmem [#allocation7], 64
    %v669 = vld [vmem:[%s668] ss:$8 sm:$0x3]
    %v671 = vperm.slane %v669, 0
    %v672 = vperm.slane %v669, 1
    %675 = vmatpush.msra.mxu0 %v634
    %676 = vmatpush.msra.mxu0 %v632
    %677 = vmatpush.msra.mxu0 %v630
    %678 = vmatpush.msra.mxu0 %v628
    %679 = vmatpush.msra.mxu0 %v626
    %680 = vmatpush.msra.mxu0 %v624
    %681 = vmatpush.msra.mxu0 %v622
    %682 = vmatpush.msra.mxu0 %v620
    %683 = vmatpush.msra.mxu0 %v618
    %684 = vmatpush.msra.mxu0 %v616
    %685 = vmatpush.msra.mxu0 %v614
    %686 = vmatpush.msra.mxu0 %v612
    %687 = vmatpush.msra.mxu0 %v610
    %688 = vmatpush.msra.mxu0 %v608
    %689 = vmatpush.msra.mxu0 %v606
    %690 = vmatpush.msra.mxu0 %v604
    %691 = vmatmul.f32.gmra.mxu0 %v601
    %v692 = vpop.f32.mrf.mxu0
    %v693 = vadd.f32 %v671, %v692
    %694 = vdwg.mxu0
    %695 = vmatpush.msra.mxu0 %v666
    %696 = vmatpush.msra.mxu0 %v664
    %697 = vmatpush.msra.mxu0 %v662
    %698 = vmatpush.msra.mxu0 %v660
    %699 = vmatpush.msra.mxu0 %v658
    %700 = vmatpush.msra.mxu0 %v656
    %701 = vmatpush.msra.mxu0 %v654
    %702 = vmatpush.msra.mxu0 %v652
    %703 = vmatpush.msra.mxu0 %v650
    %704 = vmatpush.msra.mxu0 %v648
    %705 = vmatpush.msra.mxu0 %v646
    %706 = vmatpush.msra.mxu0 %v644
    %707 = vmatpush.msra.mxu0 %v642
    %708 = vmatpush.msra.mxu0 %v640
    %709 = vmatpush.msra.mxu0 %v638
    %710 = vmatpush.msra.mxu0 %v636
    %711 = vmatmul.f32.gmra.mxu0 %v602
    %v712 = vpop.f32.mrf.mxu0
    %v713 = vadd.f32 %v693, %v712
    %714 = vdwg.mxu0
    %715 = vmatpush.msra.mxu0 %v635
    %716 = vmatpush.msra.mxu0 %v633
    %717 = vmatpush.msra.mxu0 %v631
    %718 = vmatpush.msra.mxu0 %v629
    %719 = vmatpush.msra.mxu0 %v627
    %720 = vmatpush.msra.mxu0 %v625
    %721 = vmatpush.msra.mxu0 %v623
    %722 = vmatpush.msra.mxu0 %v621
    %723 = vmatpush.msra.mxu0 %v619
    %724 = vmatpush.msra.mxu0 %v617
    %725 = vmatpush.msra.mxu0 %v615
    %726 = vmatpush.msra.mxu0 %v613
    %727 = vmatpush.msra.mxu0 %v611
    %728 = vmatpush.msra.mxu0 %v609
    %729 = vmatpush.msra.mxu0 %v607
    %730 = vmatpush.msra.mxu0 %v605
    %731 = vmatmul.f32.gmra.mxu0 %v601
    %v732 = vpop.f32.mrf.mxu0
    %v733 = vadd.f32 %v672, %v732
    %734 = vdwg.mxu0
    %735 = vmatpush.msra.mxu0 %v667
    %736 = vmatpush.msra.mxu0 %v665
    %737 = vmatpush.msra.mxu0 %v663
    %738 = vmatpush.msra.mxu0 %v661
    %739 = vmatpush.msra.mxu0 %v659
    %740 = vmatpush.msra.mxu0 %v657
    %741 = vmatpush.msra.mxu0 %v655
    %742 = vmatpush.msra.mxu0 %v653
    %743 = vmatpush.msra.mxu0 %v651
    %744 = vmatpush.msra.mxu0 %v649
    %745 = vmatpush.msra.mxu0 %v647
    %746 = vmatpush.msra.mxu0 %v645
    %747 = vmatpush.msra.mxu0 %v643
    %748 = vmatpush.msra.mxu0 %v641
    %749 = vmatpush.msra.mxu0 %v639
    %750 = vmatpush.msra.mxu0 %v637
    %751 = vmatmul.f32.gmra.mxu0 %v602
    %v752 = vpop.f32.mrf.mxu0
    %v753 = vadd.f32 %v733, %v752
    %754 = vdwg.mxu0
    %v755 = vmax.f32 %v713, 0.0
    %v756 = vmax.f32 %v753, 0.0
    %s757 = scalar_lea.vmem [#allocation5], 2560
    %v758 = vld [vmem:[%s757] sm:$0xff]
    %v759 = vld [vmem:[%s757 + $0x10] sm:$0xff]
    %v760 = vld [vmem:[%s757 + $0x20] sm:$0xff]
    %v761 = vld [vmem:[%s757 + $0x30] sm:$0xff]
    %v762 = vld [vmem:[%s757 + $0x40] sm:$0xff]
    %v763 = vld [vmem:[%s757 + $0x50] sm:$0xff]
    %v764 = vld [vmem:[%s757 + $0x60] sm:$0xff]
    %v765 = vld [vmem:[%s757 + $0x70] sm:$0xff]
    %v766 = vld [vmem:[%s757 + $0x80] sm:$0xff]
    %v767 = vld [vmem:[%s757 + $0x90] sm:$0xff]
    %v768 = vld [vmem:[%s757 + $0xa0] sm:$0xff]
    %v769 = vld [vmem:[%s757 + $0xb0] sm:$0xff]
    %v770 = vld [vmem:[%s757 + $0xc0] sm:$0xff]
    %v771 = vld [vmem:[%s757 + $0xd0] sm:$0xff]
    %v772 = vld [vmem:[%s757 + $0xe0] sm:$0xff]
    %v773 = vld [vmem:[%s757 + $0xf0] sm:$0xff]
    %v774 = vld [vmem:[%s757 + $0x100] sm:$0xff]
    %v775 = vld [vmem:[%s757 + $0x110] sm:$0xff]
    %v776 = vld [vmem:[%s757 + $0x120] sm:$0xff]
    %v777 = vld [vmem:[%s757 + $0x130] sm:$0xff]
    %v778 = vld [vmem:[%s757 + $0x140] sm:$0xff]
    %v779 = vld [vmem:[%s757 + $0x150] sm:$0xff]
    %v780 = vld [vmem:[%s757 + $0x160] sm:$0xff]
    %v781 = vld [vmem:[%s757 + $0x170] sm:$0xff]
    %v782 = vld [vmem:[%s757 + $0x180] sm:$0xff]
    %v783 = vld [vmem:[%s757 + $0x190] sm:$0xff]
    %v784 = vld [vmem:[%s757 + $0x1a0] sm:$0xff]
    %v785 = vld [vmem:[%s757 + $0x1b0] sm:$0xff]
    %v786 = vld [vmem:[%s757 + $0x1c0] sm:$0xff]
    %v787 = vld [vmem:[%s757 + $0x1d0] sm:$0xff]
    %v788 = vld [vmem:[%s757 + $0x1e0] sm:$0xff]
    %v789 = vld [vmem:[%s757 + $0x1f0] sm:$0xff]
    %s790 = scalar_lea.vmem [#allocation7], 80
    %v791 = vld [vmem:[%s790] ss:$0 sm:$0xff]
    %792 = vmatpush.msra.mxu0 %v773
    %793 = vmatpush.msra.mxu0 %v772
    %794 = vmatpush.msra.mxu0 %v771
    %795 = vmatpush.msra.mxu0 %v770
    %796 = vmatpush.msra.mxu0 %v769
    %797 = vmatpush.msra.mxu0 %v768
    %798 = vmatpush.msra.mxu0 %v767
    %799 = vmatpush.msra.mxu0 %v766
    %800 = vmatpush.msra.mxu0 %v765
    %801 = vmatpush.msra.mxu0 %v764
    %802 = vmatpush.msra.mxu0 %v763
    %803 = vmatpush.msra.mxu0 %v762
    %804 = vmatpush.msra.mxu0 %v761
    %805 = vmatpush.msra.mxu0 %v760
    %806 = vmatpush.msra.mxu0 %v759
    %807 = vmatpush.msra.mxu0 %v758
    %808 = vmatmul.f32.gmra.mxu0 %v755
    %v809 = vpop.f32.mrf.mxu0
    %v810 = vadd.f32 %v791, %v809
    %811 = vdwg.mxu0
    %812 = vmatpush.msra.mxu0 %v789
    %813 = vmatpush.msra.mxu0 %v788
    %814 = vmatpush.msra.mxu0 %v787
    %815 = vmatpush.msra.mxu0 %v786
    %816 = vmatpush.msra.mxu0 %v785
    %817 = vmatpush.msra.mxu0 %v784
    %818 = vmatpush.msra.mxu0 %v783
    %819 = vmatpush.msra.mxu0 %v782
    %820 = vmatpush.msra.mxu0 %v781
    %821 = vmatpush.msra.mxu0 %v780
    %822 = vmatpush.msra.mxu0 %v779
    %823 = vmatpush.msra.mxu0 %v778
    %824 = vmatpush.msra.mxu0 %v777
    %825 = vmatpush.msra.mxu0 %v776
    %826 = vmatpush.msra.mxu0 %v775
    %827 = vmatpush.msra.mxu0 %v774
    %828 = vmatmul.f32.gmra.mxu0 %v756
    %v829 = vpop.f32.mrf.mxu0
    %v830 = vadd.f32 %v810, %v829
    %831 = vdwg.mxu0
    %832 = vst [vmem:[#allocation8] sm:$0xff] %v830
    // Predicated region
    $region26: #{tpu_custom_call.1} parent=1 // pred_check
      _
    $region27: #{tpu_custom_call.1} parent=1 // pred_check_branch
      %834 = sbr.rel (0) target = $region29
    $region28: #{tpu_custom_call.1} parent=1 // pred_region
      %836 = vsyncadd [#allocation4], 0
      %s838 = sshll.u32 [#allocation8], 4
      %s839 = int_to_ptr.vmem [resolvable:$true] %s838
      %s840 = sshll.u32 %s3, 4
      %s841 = int_to_ptr.hbm [resolvable:$true] %s840
      %843 = dma.vmem_to_hbm [thread:$0]  %s839, 128, %s841, [#allocation4]
    $region29: #{tpu_custom_call.1} parent=1 // pred_fallthru
      _
    // Predicated region
    $region30: #{tpu_custom_call.1} parent=1 // pred_check
      _
    $region31: #{tpu_custom_call.1} parent=1 // pred_check_branch
      %845 = sbr.rel (0) target = $region33
    $region32: #{tpu_custom_call.1} parent=1 // pred_region
      %847 = dma.done [#allocation4], 128
    $region33: #{tpu_custom_call.1} parent=1 // pred_fallthru
      _
    %848 = vsyncpa [#allocation3], 1
    %849 = vsyncpa [#allocation6], 1
    %850 = vsyncpa [#allocation4], 1

</llo_original>
